<compile_context>
chip_gen: v6e
topology: v6e:2x2x1
jax: 0.10.0
libtpu: 0.0.40
codegen_flags: <defaults>
</compile_context>

<pallas_src>
import jax
import jax.numpy as jnp
from jax.experimental import pallas as pl
from jax.experimental.pallas import tpu as pltpu

_IN_FEATURES = 9
_K_PAD = 16            # layer-1 contraction dim padded 9 -> 16
_H1, _H2, _OUT = 128, 64, 4
_MAX_TILE_B = 2048     # batch tile target (~2 MiB VMEM footprint; v7x-friendly)
_POSINF = 1.0e5
_NEGINF = -1.0e5


def _nan_to_num(v):
    """torch.nan_to_num(v, nan=0.0, posinf=1e5, neginf=-1e5) on the VPU."""
    v = jnp.where(jnp.isnan(v), jnp.float32(0.0), v)
    v = jnp.where(v == jnp.inf, jnp.float32(_POSINF), v)
    v = jnp.where(v == -jnp.inf, jnp.float32(_NEGINF), v)
    return v


def _movement_kernel(x_ref, w1_ref, b1_ref, w2_ref, b2_ref, w3_ref, b3_ref, o_ref):
    # One (TILE_B, *) batch tile per grid step; weights are VMEM-resident across steps.
    x = _nan_to_num(x_ref[...])                                    # input sanitization

    # Linear(9->128) (K padded to 16) + ReLU + nan_to_num
    h = jnp.dot(x, w1_ref[...], preferred_element_type=jnp.float32) + b1_ref[...]
    h = _nan_to_num(jnp.maximum(h, 0.0))

    # Linear(128->64) + ReLU + nan_to_num
    h = jnp.dot(h, w2_ref[...], preferred_element_type=jnp.float32) + b2_ref[...]
    h = _nan_to_num(jnp.maximum(h, 0.0))

    # Linear(64->4) + nan_to_num
    logits = jnp.dot(h, w3_ref[...], preferred_element_type=jnp.float32) + b3_ref[...]
    logits = _nan_to_num(logits)
    # NOTE: the module's "zero the logits if NaN/Inf" branch is dead after nan_to_num.

    # Softmax over the 4 classes (lane axis), numerically stable.
    m = jnp.max(logits, axis=-1, keepdims=True)
    e = jnp.exp(logits - m)
    denom = jnp.sum(e, axis=-1, keepdims=True)
    # TODO(synk): the (TILE_B, 4) store is lane-masked (4/128 lanes); the lane-dense
    # (TILE_B//32, 128) repack requires a cross-lane relayout left out on purpose.
    o_ref[...] = (e / denom).astype(o_ref.dtype)


def _round_up(n, m):
    return (n + m - 1) // m * m


@jax.jit
def movement_nn(x, params):
    B = x.shape[0]
    tile_b = min(_MAX_TILE_B, _round_up(B, 8))
    b_pad = _round_up(B, tile_b)

    # Pad the batch to a tile multiple and the layer-1 contraction dim 9 -> 16.
    xp = jnp.pad(x.astype(jnp.float32),
                 ((0, b_pad - B), (0, _K_PAD - x.shape[1])))
    w1 = jnp.pad(params["w1"], ((0, _K_PAD - params["w1"].shape[0]), (0, 0)))

    const = lambda i: (0, 0)   # weights/biases resident across the batch grid

    flops = 2 * b_pad * (_K_PAD * _H1 + _H1 * _H2 + _H2 * _OUT)
    bytes_accessed = 4 * (b_pad * (_K_PAD + _OUT)
                          + _K_PAD * _H1 + _H1
                          + _H1 * _H2 + _H2
                          + _H2 * _OUT + _OUT)

    out = pl.pallas_call(
        _movement_kernel,
        out_shape=jax.ShapeDtypeStruct((b_pad, _OUT), jnp.float32),
        grid=(b_pad // tile_b,),
        in_specs=[
            pl.BlockSpec((tile_b, _K_PAD), lambda i: (i, 0)),   # x: tiled over batch
            pl.BlockSpec((_K_PAD, _H1), const),                 # w1 (padded)
            pl.BlockSpec((1, _H1), const),                      # b1
            pl.BlockSpec((_H1, _H2), const),                    # w2
            pl.BlockSpec((1, _H2), const),                      # b2
            pl.BlockSpec((_H2, _OUT), const),                   # w3
            pl.BlockSpec((1, _OUT), const),                     # b3
        ],
        out_specs=pl.BlockSpec((tile_b, _OUT), lambda i: (i, 0)),
        compiler_params=pltpu.CompilerParams(
            dimension_semantics=("parallel",)),                 # v7x: shard tiles over both TCs
        cost_estimate=pl.CostEstimate(
            flops=flops,
            transcendentals=b_pad * _OUT,
            bytes_accessed=bytes_accessed),
    )(xp, w1, params["b1"], params["w2"], params["b2"], params["w3"], params["b3"])
    return out[:B]


def init_params(key):
    """Mirror the PyTorch module: xavier_normal_ weights, default U(-1/sqrt(fan_in)) bias."""
    def layer(k, fan_in, fan_out):
        kw, kb = jax.random.split(k)
        std = (2.0 / (fan_in + fan_out)) ** 0.5
        w = std * jax.random.normal(kw, (fan_in, fan_out), jnp.float32)
        bound = 1.0 / (fan_in ** 0.5)
        b = jax.random.uniform(kb, (1, fan_out), jnp.float32, -bound, bound)
        return w, b

    k1, k2, k3 = jax.random.split(key, 3)
    w1, b1 = layer(k1, _IN_FEATURES, _H1)
    w2, b2 = layer(k2, _H1, _H2)
    w3, b3 = layer(k3, _H2, _OUT)
    return {"w1": w1, "b1": b1, "w2": w2, "b2": b2, "w3": w3, "b3": b3}


def reference_forward(x, p):
    """Pure-JAX reference with identical semantics."""
    x = jnp.nan_to_num(x, nan=0.0, posinf=_POSINF, neginf=_NEGINF)
    h = jnp.nan_to_num(jnp.maximum(x @ p["w1"] + p["b1"], 0.0),
                       nan=0.0, posinf=_POSINF, neginf=_NEGINF)
    h = jnp.nan_to_num(jnp.maximum(h @ p["w2"] + p["b2"], 0.0),
                       nan=0.0, posinf=_POSINF, neginf=_NEGINF)
    logits = jnp.nan_to_num(h @ p["w3"] + p["b3"],
                            nan=0.0, posinf=_POSINF, neginf=_NEGINF)
    return jax.nn.softmax(logits, axis=-1)


if __name__ == "__main__":
    key = jax.random.PRNGKey(0)
    kx, kp = jax.random.split(key)

    params = init_params(kp)

    B = 8
    x = jax.random.normal(kx, (B, _IN_FEATURES), jnp.float32)
    x = x.at[0, 0].set(jnp.nan)            # exercise the nan_to_num path

    out = jax.block_until_ready(movement_nn(x, params))
    ref = reference_forward(x, params)
    assert out.shape == (B, _OUT)
    assert bool(jnp.all(jnp.isfinite(out)))
    assert jnp.allclose(out, ref, atol=1e-4, rtol=1e-4), "mismatch vs reference"
    assert jnp.allclose(jnp.sum(out, axis=-1), 1.0, atol=1e-4)

    # Non-multiple-of-8 batch exercises the pad / slice-back path.
    B2 = 37
    x2 = jax.random.normal(jax.random.PRNGKey(1), (B2, _IN_FEATURES), jnp.float32)
    out2 = jax.block_until_ready(movement_nn(x2, params))
    assert out2.shape == (B2, _OUT)
    assert jnp.allclose(out2, reference_forward(x2, params), atol=1e-4, rtol=1e-4)

    print("KERNEL_OK")
</pallas_src>

<mosaic_0001>
module attributes {stable_mosaic.version = 11 : i64} {
  func.func @_movement_kernel(%arg0: i32, %arg1: memref<8x16xf32, #tpu.memory_space<vmem>>, %arg2: memref<16x128xf32, #tpu.memory_space<vmem>>, %arg3: memref<1x128xf32, #tpu.memory_space<vmem>>, %arg4: memref<128x64xf32, #tpu.memory_space<vmem>>, %arg5: memref<1x64xf32, #tpu.memory_space<vmem>>, %arg6: memref<64x4xf32, #tpu.memory_space<vmem>>, %arg7: memref<1x4xf32, #tpu.memory_space<vmem>>, %arg8: memref<8x4xf32, #tpu.memory_space<vmem>>) attributes {dimension_semantics = [#tpu.dimension_semantics<parallel>], iteration_bounds = array<i64: 1>, scalar_prefetch = 0 : i64, scratch_operands = 0 : i64, tpu.core_type = #tpu.core_type<tc>, window_params = [{transform_indices = @transform_0, window_bounds = array<i64: 8, 16>}, {pipeline_mode = #tpu.pipeline_mode<synchronous>, transform_indices = @transform_1, window_bounds = array<i64: 16, 128>}, {pipeline_mode = #tpu.pipeline_mode<synchronous>, transform_indices = @transform_2, window_bounds = array<i64: 1, 128>}, {pipeline_mode = #tpu.pipeline_mode<synchronous>, transform_indices = @transform_3, window_bounds = array<i64: 128, 64>}, {pipeline_mode = #tpu.pipeline_mode<synchronous>, transform_indices = @transform_4, window_bounds = array<i64: 1, 64>}, {pipeline_mode = #tpu.pipeline_mode<synchronous>, transform_indices = @transform_5, window_bounds = array<i64: 64, 4>}, {pipeline_mode = #tpu.pipeline_mode<synchronous>, transform_indices = @transform_6, window_bounds = array<i64: 1, 4>}, {transform_indices = @transform_7, window_bounds = array<i64: 8, 4>}]} {
    %c0 = arith.constant 0 : index
    %c0_0 = arith.constant 0 : index
    %0 = vector.load %arg1[%c0, %c0_0] : memref<8x16xf32, #tpu.memory_space<vmem>>, vector<8x16xf32>
    %1 = arith.cmpf one, %0, %0 : vector<8x16xf32>
    %cst = arith.constant 0.000000e+00 : f32
    %2 = vector.broadcast %cst : f32 to vector<8x16xf32>
    %3 = arith.select %1, %2, %0 : vector<8x16xi1>, vector<8x16xf32>
    %cst_1 = arith.constant 0x7F800000 : f32
    %4 = vector.broadcast %cst_1 : f32 to vector<8x16xf32>
    %5 = arith.cmpf oeq, %3, %4 : vector<8x16xf32>
    %cst_2 = arith.constant 1.000000e+05 : f32
    %6 = vector.broadcast %cst_2 : f32 to vector<8x16xf32>
    %7 = arith.select %5, %6, %3 : vector<8x16xi1>, vector<8x16xf32>
    %cst_3 = arith.constant 0xFF800000 : f32
    %8 = vector.broadcast %cst_3 : f32 to vector<8x16xf32>
    %9 = arith.cmpf oeq, %7, %8 : vector<8x16xf32>
    %cst_4 = arith.constant -1.000000e+05 : f32
    %10 = vector.broadcast %cst_4 : f32 to vector<8x16xf32>
    %11 = arith.select %9, %10, %7 : vector<8x16xi1>, vector<8x16xf32>
    %c0_5 = arith.constant 0 : index
    %c0_6 = arith.constant 0 : index
    %12 = vector.load %arg2[%c0_5, %c0_6] : memref<16x128xf32, #tpu.memory_space<vmem>>, vector<16x128xf32>
    %cst_7 = arith.constant dense<0.000000e+00> : vector<8x128xf32>
    %13 = tpu.matmul %11, %12, %cst_7 {dimension_numbers = #tpu.dot_dimension_numbers<[1], [0], [0], [1], [0, 0, 1, 1], [], []>} : vector<8x16xf32>, vector<16x128xf32>, vector<8x128xf32> -> vector<8x128xf32>
    %c0_8 = arith.constant 0 : index
    %c0_9 = arith.constant 0 : index
    %14 = vector.load %arg3[%c0_8, %c0_9] : memref<1x128xf32, #tpu.memory_space<vmem>>, vector<1x128xf32>
    %15 = vector.broadcast %14 : vector<1x128xf32> to vector<8x128xf32>
    %16 = arith.addf %13, %15 : vector<8x128xf32>
    %cst_10 = arith.constant 0.000000e+00 : f32
    %17 = vector.broadcast %cst_10 : f32 to vector<8x128xf32>
    %18 = arith.maximumf %16, %17 : vector<8x128xf32>
    %19 = arith.cmpf one, %18, %18 : vector<8x128xf32>
    %cst_11 = arith.constant 0.000000e+00 : f32
    %20 = vector.broadcast %cst_11 : f32 to vector<8x128xf32>
    %21 = arith.select %19, %20, %18 : vector<8x128xi1>, vector<8x128xf32>
    %cst_12 = arith.constant 0x7F800000 : f32
    %22 = vector.broadcast %cst_12 : f32 to vector<8x128xf32>
    %23 = arith.cmpf oeq, %21, %22 : vector<8x128xf32>
    %cst_13 = arith.constant 1.000000e+05 : f32
    %24 = vector.broadcast %cst_13 : f32 to vector<8x128xf32>
    %25 = arith.select %23, %24, %21 : vector<8x128xi1>, vector<8x128xf32>
    %cst_14 = arith.constant 0xFF800000 : f32
    %26 = vector.broadcast %cst_14 : f32 to vector<8x128xf32>
    %27 = arith.cmpf oeq, %25, %26 : vector<8x128xf32>
    %cst_15 = arith.constant -1.000000e+05 : f32
    %28 = vector.broadcast %cst_15 : f32 to vector<8x128xf32>
    %29 = arith.select %27, %28, %25 : vector<8x128xi1>, vector<8x128xf32>
    %c0_16 = arith.constant 0 : index
    %c0_17 = arith.constant 0 : index
    %30 = vector.load %arg4[%c0_16, %c0_17] : memref<128x64xf32, #tpu.memory_space<vmem>>, vector<128x64xf32>
    %cst_18 = arith.constant dense<0.000000e+00> : vector<8x64xf32>
    %31 = tpu.matmul %29, %30, %cst_18 {dimension_numbers = #tpu.dot_dimension_numbers<[1], [0], [0], [1], [0, 0, 1, 1], [], []>} : vector<8x128xf32>, vector<128x64xf32>, vector<8x64xf32> -> vector<8x64xf32>
    %c0_19 = arith.constant 0 : index
    %c0_20 = arith.constant 0 : index
    %32 = vector.load %arg5[%c0_19, %c0_20] : memref<1x64xf32, #tpu.memory_space<vmem>>, vector<1x64xf32>
    %33 = vector.broadcast %32 : vector<1x64xf32> to vector<8x64xf32>
    %34 = arith.addf %31, %33 : vector<8x64xf32>
    %cst_21 = arith.constant 0.000000e+00 : f32
    %35 = vector.broadcast %cst_21 : f32 to vector<8x64xf32>
    %36 = arith.maximumf %34, %35 : vector<8x64xf32>
    %37 = arith.cmpf one, %36, %36 : vector<8x64xf32>
    %cst_22 = arith.constant 0.000000e+00 : f32
    %38 = vector.broadcast %cst_22 : f32 to vector<8x64xf32>
    %39 = arith.select %37, %38, %36 : vector<8x64xi1>, vector<8x64xf32>
    %cst_23 = arith.constant 0x7F800000 : f32
    %40 = vector.broadcast %cst_23 : f32 to vector<8x64xf32>
    %41 = arith.cmpf oeq, %39, %40 : vector<8x64xf32>
    %cst_24 = arith.constant 1.000000e+05 : f32
    %42 = vector.broadcast %cst_24 : f32 to vector<8x64xf32>
    %43 = arith.select %41, %42, %39 : vector<8x64xi1>, vector<8x64xf32>
    %cst_25 = arith.constant 0xFF800000 : f32
    %44 = vector.broadcast %cst_25 : f32 to vector<8x64xf32>
    %45 = arith.cmpf oeq, %43, %44 : vector<8x64xf32>
    %cst_26 = arith.constant -1.000000e+05 : f32
    %46 = vector.broadcast %cst_26 : f32 to vector<8x64xf32>
    %47 = arith.select %45, %46, %43 : vector<8x64xi1>, vector<8x64xf32>
    %c0_27 = arith.constant 0 : index
    %c0_28 = arith.constant 0 : index
    %48 = vector.load %arg6[%c0_27, %c0_28] : memref<64x4xf32, #tpu.memory_space<vmem>>, vector<64x4xf32>
    %cst_29 = arith.constant dense<0.000000e+00> : vector<8x4xf32>
    %49 = tpu.matmul %47, %48, %cst_29 {dimension_numbers = #tpu.dot_dimension_numbers<[1], [0], [0], [1], [0, 0, 1, 1], [], []>} : vector<8x64xf32>, vector<64x4xf32>, vector<8x4xf32> -> vector<8x4xf32>
    %c0_30 = arith.constant 0 : index
    %c0_31 = arith.constant 0 : index
    %50 = vector.load %arg7[%c0_30, %c0_31] : memref<1x4xf32, #tpu.memory_space<vmem>>, vector<1x4xf32>
    %51 = vector.broadcast %50 : vector<1x4xf32> to vector<8x4xf32>
    %52 = arith.addf %49, %51 : vector<8x4xf32>
    %53 = arith.cmpf one, %52, %52 : vector<8x4xf32>
    %cst_32 = arith.constant 0.000000e+00 : f32
    %54 = vector.broadcast %cst_32 : f32 to vector<8x4xf32>
    %55 = arith.select %53, %54, %52 : vector<8x4xi1>, vector<8x4xf32>
    %cst_33 = arith.constant 0x7F800000 : f32
    %56 = vector.broadcast %cst_33 : f32 to vector<8x4xf32>
    %57 = arith.cmpf oeq, %55, %56 : vector<8x4xf32>
    %cst_34 = arith.constant 1.000000e+05 : f32
    %58 = vector.broadcast %cst_34 : f32 to vector<8x4xf32>
    %59 = arith.select %57, %58, %55 : vector<8x4xi1>, vector<8x4xf32>
    %cst_35 = arith.constant 0xFF800000 : f32
    %60 = vector.broadcast %cst_35 : f32 to vector<8x4xf32>
    %61 = arith.cmpf oeq, %59, %60 : vector<8x4xf32>
    %cst_36 = arith.constant -1.000000e+05 : f32
    %62 = vector.broadcast %cst_36 : f32 to vector<8x4xf32>
    %63 = arith.select %61, %62, %59 : vector<8x4xi1>, vector<8x4xf32>
    %cst_37 = arith.constant dense<0xFF800000> : vector<8xf32>
    %64 = vector.multi_reduction <maximumf>, %63, %cst_37 [1] : vector<8x4xf32> to vector<8xf32>
    %65 = vector.shape_cast %64 : vector<8xf32> to vector<8x1xf32>
    %66 = vector.broadcast %65 : vector<8x1xf32> to vector<8x4xf32>
    %67 = arith.subf %63, %66 : vector<8x4xf32>
    %68 = math.exp %67 : vector<8x4xf32>
    %cst_38 = arith.constant dense<0.000000e+00> : vector<8xf32>
    %69 = vector.multi_reduction <add>, %68, %cst_38 [1] : vector<8x4xf32> to vector<8xf32>
    %70 = vector.shape_cast %69 : vector<8xf32> to vector<8x1xf32>
    %71 = vector.broadcast %70 : vector<8x1xf32> to vector<8x4xf32>
    %72 = arith.divf %68, %71 : vector<8x4xf32>
    %c0_39 = arith.constant 0 : index
    %c0_40 = arith.constant 0 : index
    %73 = vector.load %arg8[%c0_39, %c0_40] : memref<8x4xf32, #tpu.memory_space<vmem>>, vector<8x4xf32>
    tpu.vector_store %arg8[%c0_39, %c0_40], %72 {strides = array<i32>} : memref<8x4xf32, #tpu.memory_space<vmem>>, vector<8x4xf32>,
    return
  }
  func.func @transform_0(%arg0: i32) -> (i32, i32) {
    %c0_i32 = arith.constant 0 : i32
    %c0_i32_0 = arith.constant 0 : i32
    return %arg0, %c0_i32 : i32, i32
  }
  func.func @transform_1(%arg0: i32) -> (i32, i32) {
    %c0_i32 = arith.constant 0 : i32
    %c0_i32_0 = arith.constant 0 : i32
    %c0_i32_1 = arith.constant 0 : i32
    return %c0_i32, %c0_i32_0 : i32, i32
  }
  func.func @transform_2(%arg0: i32) -> (i32, i32) {
    %c0_i32 = arith.constant 0 : i32
    %c0_i32_0 = arith.constant 0 : i32
    %c0_i32_1 = arith.constant 0 : i32
    return %c0_i32, %c0_i32_0 : i32, i32
  }
  func.func @transform_3(%arg0: i32) -> (i32, i32) {
    %c0_i32 = arith.constant 0 : i32
    %c0_i32_0 = arith.constant 0 : i32
    %c0_i32_1 = arith.constant 0 : i32
    return %c0_i32, %c0_i32_0 : i32, i32
  }
  func.func @transform_4(%arg0: i32) -> (i32, i32) {
    %c0_i32 = arith.constant 0 : i32
    %c0_i32_0 = arith.constant 0 : i32
    %c0_i32_1 = arith.constant 0 : i32
    return %c0_i32, %c0_i32_0 : i32, i32
  }
  func.func @transform_5(%arg0: i32) -> (i32, i32) {
    %c0_i32 = arith.constant 0 : i32
    %c0_i32_0 = arith.constant 0 : i32
    %c0_i32_1 = arith.constant 0 : i32
    return %c0_i32, %c0_i32_0 : i32, i32
  }
  func.func @transform_6(%arg0: i32) -> (i32, i32) {
    %c0_i32 = arith.constant 0 : i32
    %c0_i32_0 = arith.constant 0 : i32
    %c0_i32_1 = arith.constant 0 : i32
    return %c0_i32, %c0_i32_0 : i32, i32
  }
  func.func @transform_7(%arg0: i32) -> (i32, i32) {
    %c0_i32 = arith.constant 0 : i32
    %c0_i32_0 = arith.constant 0 : i32
    return %arg0, %c0_i32 : i32, i32
  }
}

</mosaic_0001>

<llo_original>
// kernel: movement_nn.1
$region0: #{movement_nn.1}
  #allocation0 [shape = 'u32[]', space=smem, size = 0x4, offset = 0x4, fixed_abs, tag = 'smem constant byte address 0x4 - core index']
  #allocation1 [shape = 'u32[144,128]{1,0:T(1,128)}', space=vmem, size = 0x12000, scoped, tag = 'internal scratch']
  %s0 = inlined_call_operand.vmem [shape: f32[8,16], index: 0, kind: input, shape index: {}]
  %s1 = inlined_call_operand.vmem [shape: f32[16,128], index: 1, kind: input, shape index: {}]
  %s2 = inlined_call_operand.vmem [shape: f32[1,128], index: 2, kind: input, shape index: {}]
  %s3 = inlined_call_operand.vmem [shape: f32[128,64], index: 3, kind: input, shape index: {}]
  %s4 = inlined_call_operand.vmem [shape: f32[1,64], index: 4, kind: input, shape index: {}]
  %s5 = inlined_call_operand.vmem [shape: f32[64,4], index: 5, kind: input, shape index: {}]
  %s6 = inlined_call_operand.vmem [shape: f32[1,4], index: 6, kind: input, shape index: {}]
  %s7 = inlined_call_operand.vmem [shape: f32[8,4], index: 7, kind: output, shape index: {}]
  %s8 = sld [smem:[#allocation0]]
  $region38: #{movement_nn.1} parent=0
    _
  %s10 = ssub.s32 1, %s8
  %s11 = scalar_select 0, %s10, %s8
  // Predicated region
  $region2: #{movement_nn.1} parent=0 // pred_check
    _
  $region3: #{movement_nn.1} parent=0 // pred_check_branch
    %13 = sbr.rel (0) target = $region5
  $region4: #{movement_nn.1} parent=0 // pred_region
    _
  $region5: #{movement_nn.1} parent=0 // pred_fallthru
    _
  // Predicated region
  $region6: #{movement_nn.1} parent=0 // pred_check
    _
  $region7: #{movement_nn.1} parent=0 // pred_check_branch
    %15 = sbr.rel (0) target = $region9
  $region8: #{movement_nn.1} parent=0 // pred_region
    _
  $region9: #{movement_nn.1} parent=0 // pred_fallthru
    _
  // Predicated region
  $region10: #{movement_nn.1} parent=0 // pred_check
    _
  $region11: #{movement_nn.1} parent=0 // pred_check_branch
    %17 = sbr.rel (0) target = $region13
  $region12: #{movement_nn.1} parent=0 // pred_region
    _
  $region13: #{movement_nn.1} parent=0 // pred_fallthru
    _
  // Predicated region
  $region14: #{movement_nn.1} parent=0 // pred_check
    _
  $region15: #{movement_nn.1} parent=0 // pred_check_branch
    %19 = sbr.rel (0) target = $region17
  $region16: #{movement_nn.1} parent=0 // pred_region
    _
  $region17: #{movement_nn.1} parent=0 // pred_fallthru
    _
  // Predicated region
  $region18: #{movement_nn.1} parent=0 // pred_check
    _
  $region19: #{movement_nn.1} parent=0 // pred_check_branch
    %21 = sbr.rel (0) target = $region21
  $region20: #{movement_nn.1} parent=0 // pred_region
    _
  $region21: #{movement_nn.1} parent=0 // pred_fallthru
    _
  // Predicated region
  $region22: #{movement_nn.1} parent=0 // pred_check
    _
  $region23: #{movement_nn.1} parent=0 // pred_check_branch
    %23 = sbr.rel (0) target = $region25
  $region24: #{movement_nn.1} parent=0 // pred_region
    _
  $region25: #{movement_nn.1} parent=0 // pred_fallthru
    _
  // Predicated region
  $region26: #{movement_nn.1} parent=0 // pred_check
    _
  $region27: #{movement_nn.1} parent=0 // pred_check_branch
    %25 = sbr.rel (0) target = $region29
  $region28: #{movement_nn.1} parent=0 // pred_region
    _
  $region29: #{movement_nn.1} parent=0 // pred_fallthru
    _
  %v26 = vld [vmem:[%s0] sm:$0xff]
  %vm27 = vcmp.ne.f32.partialorder %v26, %v26
  %v28 = vsel %vm27, 0.0, %v26
  %vm29 = vcmp.eq.f32.partialorder %v28, inf
  %v30 = vsel %vm29, 100000.0, %v28
  %vm31 = vcmp.eq.f32.partialorder %v30, -inf
  %v32 = vsel %vm31, -100000.0, %v30
  %v33 = vld [vmem:[%s1] sm:$0xff]
  %v34 = vld [vmem:[%s1 + $0x8] sm:$0xff]
  %v35 = vld [vmem:[%s2] sm:$0x1]
  %v37 = vlaneseq
  %v38 = vshrl.u32 %v37, 7
  %v39 = vsub.s32 0, %v38
  %v40 = vrot.slane %v35, %v39
  %vm42 = vcmask 130048
  %v44 = vsel %vm42, %v32, 0
  %46 = vmatprep.subr.mxu0 0.0
  %47 = vmatpush1.msra.mxu0 0.0
  %48 = vmatprep.subr.mxu0 0.0
  %49 = vmatpush1.msra.mxu0 0.0
  %50 = vmatprep.subr.mxu0 0.0
  %51 = vmatpush1.msra.mxu0 0.0
  %52 = vmatprep.subr.mxu0 0.0
  %53 = vmatpush1.msra.mxu0 0.0
  %54 = vmatprep.subr.mxu0 0.0
  %55 = vmatpush1.msra.mxu0 0.0
  %56 = vmatprep.subr.mxu0 0.0
  %57 = vmatpush1.msra.mxu0 0.0
  %58 = vmatprep.subr.mxu0 0.0
  %59 = vmatpush1.msra.mxu0 0.0
  %60 = vmatprep.subr.mxu0 0.0
  %61 = vmatpush1.msra.mxu0 0.0
  %62 = vmatprep.subr.mxu0 0.0
  %63 = vmatpush1.msra.mxu0 0.0
  %64 = vmatprep.subr.mxu0 0.0
  %65 = vmatpush1.msra.mxu0 0.0
  %66 = vmatprep.subr.mxu0 0.0
  %67 = vmatpush1.msra.mxu0 0.0
  %68 = vmatprep.subr.mxu0 0.0
  %69 = vmatpush1.msra.mxu0 0.0
  %70 = vmatprep.subr.mxu0 0.0
  %71 = vmatpush1.msra.mxu0 0.0
  %72 = vmatprep.subr.mxu0 0.0
  %73 = vmatpush1.msra.mxu0 0.0
  %74 = vmatprep.subr.mxu0 0.0
  %75 = vmatpush1.msra.mxu0 %v34
  %76 = vmatprep.subr.mxu0 0.0
  %77 = vmatpush1.msra.mxu0 %v33
  %78 = vmatprep.subr.mxu0 0.0
  %79 = vmatpush2.msra.mxu0 0.0
  %80 = vmatprep.subr.mxu0 0.0
  %81 = vmatpush2.msra.mxu0 0.0
  %82 = vmatprep.subr.mxu0 0.0
  %83 = vmatpush2.msra.mxu0 0.0
  %84 = vmatprep.subr.mxu0 0.0
  %85 = vmatpush2.msra.mxu0 0.0
  %86 = vmatprep.subr.mxu0 0.0
  %87 = vmatpush2.msra.mxu0 0.0
  %88 = vmatprep.subr.mxu0 0.0
  %89 = vmatpush2.msra.mxu0 0.0
  %90 = vmatprep.subr.mxu0 0.0
  %91 = vmatpush2.msra.mxu0 0.0
  %92 = vmatprep.subr.mxu0 0.0
  %93 = vmatpush2.msra.mxu0 0.0
  %94 = vmatprep.subr.mxu0 0.0
  %95 = vmatpush2.msra.mxu0 0.0
  %96 = vmatprep.subr.mxu0 0.0
  %97 = vmatpush2.msra.mxu0 0.0
  %98 = vmatprep.subr.mxu0 0.0
  %99 = vmatpush2.msra.mxu0 0.0
  %100 = vmatprep.subr.mxu0 0.0
  %101 = vmatpush2.msra.mxu0 0.0
  %102 = vmatprep.subr.mxu0 0.0
  %103 = vmatpush2.msra.mxu0 0.0
  %104 = vmatprep.subr.mxu0 0.0
  %105 = vmatpush2.msra.mxu0 0.0
  %106 = vmatprep.subr.mxu0 0.0
  %107 = vmatpush2.msra.mxu0 0.0
  %108 = vmatprep.subr.mxu0 0.0
  %109 = vmatpush2.msra.mxu0 0.0
  %110 = vmatprep.mubr.f32.mxu0 0.0
  %111 = vmatmul.mubr.f32.gmra.mxu0 %v44
  %v112 = vpop.f32.mrf.mxu0
  %v113 = vadd.f32 %v40, %v112
  %v114 = vpop.f32.mrf.mxu0
  %115 = vdwg.mxu0
  %v116 = vmax.f32 %v113, 0.0
  %vm117 = vcmp.ne.f32.partialorder %v116, %v116
  %v118 = vsel %vm117, 0.0, %v116
  %vm119 = vcmp.eq.f32.partialorder %v118, inf
  %v120 = vsel %vm119, 100000.0, %v118
  %vm121 = vcmp.eq.f32.partialorder %v120, -inf
  %v122 = vsel %vm121, -100000.0, %v120
  %v123 = vld [vmem:[%s3] sm:$0xff]
  %v124 = vld [vmem:[%s3 + $0x8] sm:$0xff]
  %v125 = vld [vmem:[%s3 + $0x10] sm:$0xff]
  %v126 = vld [vmem:[%s3 + $0x18] sm:$0xff]
  %v127 = vld [vmem:[%s3 + $0x20] sm:$0xff]
  %v128 = vld [vmem:[%s3 + $0x28] sm:$0xff]
  %v129 = vld [vmem:[%s3 + $0x30] sm:$0xff]
  %v130 = vld [vmem:[%s3 + $0x38] sm:$0xff]
  %v131 = vld [vmem:[%s3 + $0x40] sm:$0xff]
  %v132 = vld [vmem:[%s3 + $0x48] sm:$0xff]
  %v133 = vld [vmem:[%s3 + $0x50] sm:$0xff]
  %v134 = vld [vmem:[%s3 + $0x58] sm:$0xff]
  %v135 = vld [vmem:[%s3 + $0x60] sm:$0xff]
  %v136 = vld [vmem:[%s3 + $0x68] sm:$0xff]
  %v137 = vld [vmem:[%s3 + $0x70] sm:$0xff]
  %v138 = vld [vmem:[%s3 + $0x78] sm:$0xff]
  %v139 = vld [vmem:[%s4] sm:$0x1]
  %v141 = vlaneseq
  %v142 = vshrl.u32 %v141, 7
  %v143 = vsub.s32 0, %v142
  %v144 = vrot.slane %v139, %v143
  %146 = vmatprep.subr.mxu0 0.0
  %147 = vmatpush1.msra.mxu0 %v138
  %148 = vmatprep.subr.mxu0 0.0
  %149 = vmatpush1.msra.mxu0 %v137
  %150 = vmatprep.subr.mxu0 0.0
  %151 = vmatpush1.msra.mxu0 %v136
  %152 = vmatprep.subr.mxu0 0.0
  %153 = vmatpush1.msra.mxu0 %v135
  %154 = vmatprep.subr.mxu0 0.0
  %155 = vmatpush1.msra.mxu0 %v134
  %156 = vmatprep.subr.mxu0 0.0
  %157 = vmatpush1.msra.mxu0 %v133
  %158 = vmatprep.subr.mxu0 0.0
  %159 = vmatpush1.msra.mxu0 %v132
  %160 = vmatprep.subr.mxu0 0.0
  %161 = vmatpush1.msra.mxu0 %v131
  %162 = vmatprep.subr.mxu0 0.0
  %163 = vmatpush1.msra.mxu0 %v130
  %164 = vmatprep.subr.mxu0 0.0
  %165 = vmatpush1.msra.mxu0 %v129
  %166 = vmatprep.subr.mxu0 0.0
  %167 = vmatpush1.msra.mxu0 %v128
  %168 = vmatprep.subr.mxu0 0.0
  %169 = vmatpush1.msra.mxu0 %v127
  %170 = vmatprep.subr.mxu0 0.0
  %171 = vmatpush1.msra.mxu0 %v126
  %172 = vmatprep.subr.mxu0 0.0
  %173 = vmatpush1.msra.mxu0 %v125
  %174 = vmatprep.subr.mxu0 0.0
  %175 = vmatpush1.msra.mxu0 %v124
  %176 = vmatprep.subr.mxu0 0.0
  %177 = vmatpush1.msra.mxu0 %v123
  %178 = vmatprep.subr.mxu0 0.0
  %179 = vmatpush2.msra.mxu0 0.0
  %180 = vmatprep.subr.mxu0 0.0
  %181 = vmatpush2.msra.mxu0 0.0
  %182 = vmatprep.subr.mxu0 0.0
  %183 = vmatpush2.msra.mxu0 0.0
  %184 = vmatprep.subr.mxu0 0.0
  %185 = vmatpush2.msra.mxu0 0.0
  %186 = vmatprep.subr.mxu0 0.0
  %187 = vmatpush2.msra.mxu0 0.0
  %188 = vmatprep.subr.mxu0 0.0
  %189 = vmatpush2.msra.mxu0 0.0
  %190 = vmatprep.subr.mxu0 0.0
  %191 = vmatpush2.msra.mxu0 0.0
  %192 = vmatprep.subr.mxu0 0.0
  %193 = vmatpush2.msra.mxu0 0.0
  %194 = vmatprep.subr.mxu0 0.0
  %195 = vmatpush2.msra.mxu0 0.0
  %196 = vmatprep.subr.mxu0 0.0
  %197 = vmatpush2.msra.mxu0 0.0
  %198 = vmatprep.subr.mxu0 0.0
  %199 = vmatpush2.msra.mxu0 0.0
  %200 = vmatprep.subr.mxu0 0.0
  %201 = vmatpush2.msra.mxu0 0.0
  %202 = vmatprep.subr.mxu0 0.0
  %203 = vmatpush2.msra.mxu0 0.0
  %204 = vmatprep.subr.mxu0 0.0
  %205 = vmatpush2.msra.mxu0 0.0
  %206 = vmatprep.subr.mxu0 0.0
  %207 = vmatpush2.msra.mxu0 0.0
  %208 = vmatprep.subr.mxu0 0.0
  %209 = vmatpush2.msra.mxu0 0.0
  %210 = vmatprep.mubr.f32.mxu0 0.0
  %211 = vmatmul.mubr.f32.gmra.mxu0 %v122
  %v212 = vpop.f32.mrf.mxu0
  %v213 = vadd.f32 %v144, %v212
  %v214 = vpop.f32.mrf.mxu0
  %215 = vdwg.mxu0
  %v216 = vmax.f32 %v213, 0.0
  %vm217 = vcmp.ne.f32.partialorder %v216, %v216
  %v218 = vsel %vm217, 0.0, %v216
  %vm219 = vcmp.eq.f32.partialorder %v218, inf
  %v220 = vsel %vm219, 100000.0, %v218
  %vm221 = vcmp.eq.f32.partialorder %v220, -inf
  %v222 = vsel %vm221, -100000.0, %v220
  %v223 = vld [vmem:[%s5] sm:$0xff]
  %v224 = vld [vmem:[%s5 + $0x8] sm:$0xff]
  %v225 = vld [vmem:[%s5 + $0x10] sm:$0xff]
  %v226 = vld [vmem:[%s5 + $0x18] sm:$0xff]
  %v227 = vld [vmem:[%s5 + $0x20] sm:$0xff]
  %v228 = vld [vmem:[%s5 + $0x28] sm:$0xff]
  %v229 = vld [vmem:[%s5 + $0x30] sm:$0xff]
  %v230 = vld [vmem:[%s5 + $0x38] sm:$0xff]
  %v231 = vld [vmem:[%s6] sm:$0x1]
  %v233 = vlaneseq
  %v234 = vshrl.u32 %v233, 7
  %v235 = vsub.s32 0, %v234
  %v236 = vrot.slane %v231, %v235
  %vm238 = vcmask 523264
  %v240 = vsel %vm238, %v222, 0
  %242 = vmatprep.subr.mxu0 0.0
  %243 = vmatpush1.msra.mxu0 0.0
  %244 = vmatprep.subr.mxu0 0.0
  %245 = vmatpush1.msra.mxu0 0.0
  %246 = vmatprep.subr.mxu0 0.0
  %247 = vmatpush1.msra.mxu0 0.0
  %248 = vmatprep.subr.mxu0 0.0
  %249 = vmatpush1.msra.mxu0 0.0
  %250 = vmatprep.subr.mxu0 0.0
  %251 = vmatpush1.msra.mxu0 0.0
  %252 = vmatprep.subr.mxu0 0.0
  %253 = vmatpush1.msra.mxu0 0.0
  %254 = vmatprep.subr.mxu0 0.0
  %255 = vmatpush1.msra.mxu0 0.0
  %256 = vmatprep.subr.mxu0 0.0
  %257 = vmatpush1.msra.mxu0 0.0
  %258 = vmatprep.subr.mxu0 0.0
  %259 = vmatpush1.msra.mxu0 %v230
  %260 = vmatprep.subr.mxu0 0.0
  %261 = vmatpush1.msra.mxu0 %v229
  %262 = vmatprep.subr.mxu0 0.0
  %263 = vmatpush1.msra.mxu0 %v228
  %264 = vmatprep.subr.mxu0 0.0
  %265 = vmatpush1.msra.mxu0 %v227
  %266 = vmatprep.subr.mxu0 0.0
  %267 = vmatpush1.msra.mxu0 %v226
  %268 = vmatprep.subr.mxu0 0.0
  %269 = vmatpush1.msra.mxu0 %v225
  %270 = vmatprep.subr.mxu0 0.0
  %271 = vmatpush1.msra.mxu0 %v224
  %272 = vmatprep.subr.mxu0 0.0
  %273 = vmatpush1.msra.mxu0 %v223
  %274 = vmatprep.subr.mxu0 0.0
  %275 = vmatpush2.msra.mxu0 0.0
  %276 = vmatprep.subr.mxu0 0.0
  %277 = vmatpush2.msra.mxu0 0.0
  %278 = vmatprep.subr.mxu0 0.0
  %279 = vmatpush2.msra.mxu0 0.0
  %280 = vmatprep.subr.mxu0 0.0
  %281 = vmatpush2.msra.mxu0 0.0
  %282 = vmatprep.subr.mxu0 0.0
  %283 = vmatpush2.msra.mxu0 0.0
  %284 = vmatprep.subr.mxu0 0.0
  %285 = vmatpush2.msra.mxu0 0.0
  %286 = vmatprep.subr.mxu0 0.0
  %287 = vmatpush2.msra.mxu0 0.0
  %288 = vmatprep.subr.mxu0 0.0
  %289 = vmatpush2.msra.mxu0 0.0
  %290 = vmatprep.subr.mxu0 0.0
  %291 = vmatpush2.msra.mxu0 0.0
  %292 = vmatprep.subr.mxu0 0.0
  %293 = vmatpush2.msra.mxu0 0.0
  %294 = vmatprep.subr.mxu0 0.0
  %295 = vmatpush2.msra.mxu0 0.0
  %296 = vmatprep.subr.mxu0 0.0
  %297 = vmatpush2.msra.mxu0 0.0
  %298 = vmatprep.subr.mxu0 0.0
  %299 = vmatpush2.msra.mxu0 0.0
  %300 = vmatprep.subr.mxu0 0.0
  %301 = vmatpush2.msra.mxu0 0.0
  %302 = vmatprep.subr.mxu0 0.0
  %303 = vmatpush2.msra.mxu0 0.0
  %304 = vmatprep.subr.mxu0 0.0
  %305 = vmatpush2.msra.mxu0 0.0
  %306 = vmatprep.mubr.f32.mxu0 0.0
  %307 = vmatmul.mubr.f32.gmra.mxu0 %v240
  %v308 = vpop.f32.mrf.mxu0
  %v309 = vadd.f32 %v236, %v308
  %v310 = vpop.f32.mrf.mxu0
  %311 = vdwg.mxu0
  %vm312 = vcmp.ne.f32.partialorder %v309, %v309
  %v313 = vsel %vm312, 0.0, %v309
  %vm314 = vcmp.eq.f32.partialorder %v313, inf
  %v315 = vsel %vm314, 100000.0, %v313
  %vm316 = vcmp.eq.f32.partialorder %v315, -inf
  %v317 = vsel %vm316, -100000.0, %v315
  %vm318 = vcmask 31744
  %v319 = vsel %vm318, %v317, -inf
  %320 = vmax.xlane.f32.xlu0 %v319
  %v321 = vpop.xlane.xlu0 %320
  %v322 = vsub.f32 %v317, %v321
  %v323 = vmul.f32 %v322, 1.442695
  %v324 = vpow.pop %v323
  %v325 = vsel %vm318, %v324, 0.0
  %326 = vadd.xlane.f32.xlu0 %v325
  %v327 = vpop.xlane.xlu0 %326
  %v328 = vrcp.pop %v327
  %v329 = vmul.f32 %v324, %v328
  %330 = vst.msk [vmem:[%s7] sm:$0xff] %vm318, %v329
  // Predicated region
  $region30: #{movement_nn.1} parent=0 // pred_check
    _
  $region31: #{movement_nn.1} parent=0 // pred_check_branch
    %332 = sbr.rel (0) target = $region33
  $region32: #{movement_nn.1} parent=0 // pred_region
    _
  $region33: #{movement_nn.1} parent=0 // pred_fallthru
    _
  // Predicated region
  $region34: #{movement_nn.1} parent=0 // pred_check
    _
  $region35: #{movement_nn.1} parent=0 // pred_check_branch
    %334 = sbr.rel (0) target = $region37
  $region36: #{movement_nn.1} parent=0 // pred_region
    _
  $region37: #{movement_nn.1} parent=0 // pred_fallthru
    _

</llo_original>
